<compile_context>
chip_gen: v7x
topology: tpu7x:2x2x1
jax: 0.10.0
libtpu: 0.0.40
codegen_flags: <defaults>
</compile_context>

<pallas_src>
import functools

import jax
import jax.numpy as jnp
from jax.experimental import pallas as pl
from jax.experimental.pallas import tpu as pltpu


LANES = 128           # lane axis width
MAX_TILE_ROWS = 4096  # 4096 x 128 x 4B = 2 MiB per f32 input tile
MIN_TILE_ROWS = 32    # keeps int8 / bf16 blocks on native tile boundaries
NUM_SPLITS = 2        # leading "parallel" axis (v7x: one shard per TensorCore)


def _round_up(a: int, b: int) -> int:
    return (a + b - 1) // b * b


def _itm_loss_kernel(x_ref, y_ref, out_ref, *, n_total, tile_rows, lanes,
                     rows_per_split, need_mask):
    i = pl.program_id(1)

    # Zero the resident accumulator block on the first step of the reduction axis.
    @pl.when(i == 0)
    def _():
        out_ref[...] = jnp.zeros_like(out_ref)

    # Load the (tile_rows, lanes) tile; cast narrow dtypes to f32 in VMEM.
    x = x_ref[0].astype(jnp.float32)
    y = y_ref[0].astype(jnp.float32)

    # Numerically stable binary_cross_entropy_with_logits:
    #   loss_i = max(x, 0) - x*y + log(1 + exp(-|x|))
    per = jnp.maximum(x, 0.0) - x * y + jnp.log1p(jnp.exp(-jnp.abs(x)))

    if need_mask:
        # Zero out contributions from padded tail elements.
        c = pl.program_id(0)
        row = jax.lax.broadcasted_iota(jnp.int32, (tile_rows, lanes), 0)
        lane = jax.lax.broadcasted_iota(jnp.int32, (tile_rows, lanes), 1)
        gidx = (c * rows_per_split + i * tile_rows + row) * lanes + lane
        per = jnp.where(gidx < n_total, per, 0.0)

    # Fold the tile down to one vreg-shaped (8, lanes) partial with pure
    # elementwise adds (no per-step cross-lane XLU reduction), then accumulate
    # into the resident output block.
    partial = per.reshape(tile_rows // 8, 8, lanes).sum(axis=0)
    out_ref[0] += partial


def itm_loss(logits: jax.Array, y_itm: jax.Array) -> jax.Array:
    """Image-Text Matching loss: BCE-with-logits, mean over the batch.

    Args:
        logits: shape (N,), any float dtype (ITM head output).
        y_itm:  shape (N,), 0/1 labels (any numeric dtype, kept narrow in HBM).
    Returns:
        Scalar float32 loss.
    """
    assert logits.ndim == 1 and y_itm.shape == logits.shape
    n = logits.shape[0]

    # --- static tiling math -------------------------------------------------
    rows_needed = pl.cdiv(n, LANES)
    rows_per_split_min = max(1, pl.cdiv(rows_needed, NUM_SPLITS))
    tile_rows = min(MAX_TILE_ROWS,
                    max(MIN_TILE_ROWS, _round_up(rows_per_split_min, MIN_TILE_ROWS)))
    rows_per_split = _round_up(rows_per_split_min, tile_rows)
    steps = rows_per_split // tile_rows
    n_pad = NUM_SPLITS * rows_per_split * LANES
    need_mask = (n_pad != n)

    # --- glue: pad + reshape to a sublane/lane-dense slab (native dtypes) ----
    x = logits
    y = y_itm
    if need_mask:
        x = jnp.pad(x, (0, n_pad - n))
        y = jnp.pad(y, (0, n_pad - n))
    x3 = x.reshape(NUM_SPLITS, rows_per_split, LANES)
    y3 = y.reshape(NUM_SPLITS, rows_per_split, LANES)

    # --- VMEM budget: 2x double-buffered input tiles + output + slack --------
    x_tile_bytes = tile_rows * LANES * x3.dtype.itemsize
    y_tile_bytes = tile_rows * LANES * y3.dtype.itemsize
    vmem_limit = 2 * (x_tile_bytes + y_tile_bytes) + (4 << 20)
    vmem_limit = max(16 << 20, min(48 << 20, vmem_limit))

    kernel = functools.partial(
        _itm_loss_kernel,
        n_total=n, tile_rows=tile_rows, lanes=LANES,
        rows_per_split=rows_per_split, need_mask=need_mask)

    partials = pl.pallas_call(
        kernel,
        out_shape=jax.ShapeDtypeStruct((NUM_SPLITS, 8, LANES), jnp.float32),
        grid_spec=pltpu.PrefetchScalarGridSpec(
            num_scalar_prefetch=0,
            grid=(NUM_SPLITS, steps),
            in_specs=[
                pl.BlockSpec((1, tile_rows, LANES), lambda c, i: (c, i, 0)),
                pl.BlockSpec((1, tile_rows, LANES), lambda c, i: (c, i, 0)),
            ],
            out_specs=pl.BlockSpec((1, 8, LANES), lambda c, i: (c, 0, 0)),
        ),
        compiler_params=pltpu.CompilerParams(
            dimension_semantics=("parallel", "arbitrary"),
            vmem_limit_bytes=vmem_limit,
        ),
    )(x3, y3)

    # Tiny final cross-core / cross-lane reduce (2 x 8 x 128 f32) + mean.
    return jnp.sum(partials) / jnp.float32(n)


def _reference(logits, y_itm):
    x = logits.astype(jnp.float32)
    y = y_itm.astype(jnp.float32)
    return jnp.mean(jnp.maximum(x, 0.0) - x * y + jnp.log1p(jnp.exp(-jnp.abs(x))))


if __name__ == "__main__":
    key = jax.random.PRNGKey(0)
    k_logits, k_labels, k_logits2, k_labels2 = jax.random.split(key, 4)

    # Small batch of image-text pairs (matches the module's (N,) inputs).
    N = 8
    logits = jax.random.normal(k_logits, (N,), dtype=jnp.float32)
    y_itm = jax.random.bernoulli(k_labels, p=0.5, shape=(N,)).astype(jnp.int8)

    loss = itm_loss(logits, y_itm)
    loss = jax.block_until_ready(loss)
    ref = _reference(logits, y_itm)
    assert jnp.allclose(loss, ref, atol=1e-5, rtol=1e-5), (loss, ref)

    # Second check: non-multiple-of-(8*128) size to exercise the mask path.
    N2 = 2000
    logits2 = jax.random.normal(k_logits2, (N2,), dtype=jnp.float32)
    y_itm2 = jax.random.bernoulli(k_labels2, p=0.5, shape=(N2,)).astype(jnp.int8)

    loss2 = itm_loss(logits2, y_itm2)
    loss2 = jax.block_until_ready(loss2)
    ref2 = _reference(logits2, y_itm2)
    assert jnp.allclose(loss2, ref2, atol=1e-5, rtol=1e-5), (loss2, ref2)

    print("KERNEL_OK")
</pallas_src>

<mosaic_0001>
module attributes {stable_mosaic.version = 11 : i64} {
  func.func @_itm_loss_kernel(%arg0: i32, %arg1: i32, %arg2: memref<1x32x128xf32, #tpu.memory_space<vmem>>, %arg3: memref<1x32x128xi8, #tpu.memory_space<vmem>>, %arg4: memref<1x8x128xf32, #tpu.memory_space<vmem>>) attributes {dimension_semantics = [#tpu.dimension_semantics<parallel>, #tpu.dimension_semantics<arbitrary>], iteration_bounds = array<i64: 2, 1>, scalar_prefetch = 0 : i64, scratch_operands = 0 : i64, tpu.core_type = #tpu.core_type<tc>, window_params = [{transform_indices = @transform_0, window_bounds = array<i64: 1, 32, 128>}, {transform_indices = @transform_1, window_bounds = array<i64: 1, 32, 128>}, {transform_indices = @transform_2, window_bounds = array<i64: 1, 8, 128>}]} {
    %c0_i32 = arith.constant 0 : i32
    %0 = arith.cmpi eq, %arg1, %c0_i32 : i32
    %1 = arith.extui %0 : i1 to i32
    %c0_i32_0 = arith.constant 0 : i32
    %2 = arith.cmpi ne, %1, %c0_i32_0 : i32
    scf.if %2 {
      %cst_16 = arith.constant 0.000000e+00 : f32
      %40 = vector.broadcast %cst_16 : f32 to vector<1x8x128xf32>
      %c0_17 = arith.constant 0 : index
      %c0_18 = arith.constant 0 : index
      %c0_19 = arith.constant 0 : index
      %41 = vector.load %arg4[%c0_17, %c0_18, %c0_19] : memref<1x8x128xf32, #tpu.memory_space<vmem>>, vector<1x8x128xf32>
      tpu.vector_store %arg4[%c0_17, %c0_18, %c0_19], %40 {strides = array<i32>} : memref<1x8x128xf32, #tpu.memory_space<vmem>>, vector<1x8x128xf32>,
    } else {
    }
    %c0 = arith.constant 0 : index
    %c0_1 = arith.constant 0 : index
    %c0_2 = arith.constant 0 : index
    %3 = vector.load %arg2[%c0, %c0_1, %c0_2] : memref<1x32x128xf32, #tpu.memory_space<vmem>>, vector<1x32x128xf32>
    %4 = vector.shape_cast %3 : vector<1x32x128xf32> to vector<32x128xf32>
    %c0_3 = arith.constant 0 : index
    %c0_4 = arith.constant 0 : index
    %c0_5 = arith.constant 0 : index
    %5 = vector.load %arg3[%c0_3, %c0_4, %c0_5] : memref<1x32x128xi8, #tpu.memory_space<vmem>>, vector<1x32x128xi8>
    %6 = vector.shape_cast %5 : vector<1x32x128xi8> to vector<32x128xi8>
    %7 = arith.sitofp %6 : vector<32x128xi8> to vector<32x128xf32>
    %cst = arith.constant 0.000000e+00 : f32
    %8 = vector.broadcast %cst : f32 to vector<32x128xf32>
    %9 = arith.maximumf %4, %8 : vector<32x128xf32>
    %10 = arith.mulf %4, %7 : vector<32x128xf32>
    %11 = arith.subf %9, %10 : vector<32x128xf32>
    %12 = math.absf %4 : vector<32x128xf32>
    %cst_6 = arith.constant 0.000000e+00 : f32
    %13 = vector.broadcast %cst_6 : f32 to vector<32x128xf32>
    %14 = arith.subf %13, %12 : vector<32x128xf32>
    %15 = math.exp %14 : vector<32x128xf32>
    %16 = math.log1p %15 : vector<32x128xf32>
    %17 = arith.addf %11, %16 : vector<32x128xf32>
    %18 = tpu.iota {dimensions = array<i32: 0>} : vector<32x128xi32>
    %19 = tpu.iota {dimensions = array<i32: 1>} : vector<32x128xi32>
    %c32_i32 = arith.constant 32 : i32
    %20 = arith.muli %arg0, %c32_i32 : i32
    %c32_i32_7 = arith.constant 32 : i32
    %21 = arith.muli %arg1, %c32_i32_7 : i32
    %22 = arith.addi %20, %21 : i32
    %23 = vector.broadcast %22 : i32 to vector<32x128xi32>
    %24 = arith.addi %23, %18 : vector<32x128xi32>
    %c128_i32 = arith.constant 128 : i32
    %25 = vector.broadcast %c128_i32 : i32 to vector<32x128xi32>
    %26 = arith.muli %24, %25 : vector<32x128xi32>
    %27 = arith.addi %26, %19 : vector<32x128xi32>
    %c8_i32 = arith.constant 8 : i32
    %28 = vector.broadcast %c8_i32 : i32 to vector<32x128xi32>
    %29 = arith.cmpi slt, %27, %28 : vector<32x128xi32>
    %cst_8 = arith.constant 0.000000e+00 : f32
    %30 = vector.broadcast %cst_8 : f32 to vector<32x128xf32>
    %31 = arith.select %29, %17, %30 : vector<32x128xi1>, vector<32x128xf32>
    %32 = vector.shape_cast %31 : vector<32x128xf32> to vector<4x8x128xf32>
    %cst_9 = arith.constant dense<0.000000e+00> : vector<8x128xf32>
    %33 = vector.multi_reduction <add>, %32, %cst_9 [0] : vector<4x8x128xf32> to vector<8x128xf32>
    %c0_10 = arith.constant 0 : index
    %c0_11 = arith.constant 0 : index
    %c0_12 = arith.constant 0 : index
    %34 = vector.load %arg4[%c0_10, %c0_11, %c0_12] : memref<1x8x128xf32, #tpu.memory_space<vmem>>, vector<1x8x128xf32>
    %35 = vector.shape_cast %34 : vector<1x8x128xf32> to vector<8x128xf32>
    %36 = arith.addf %35, %33 : vector<8x128xf32>
    %c0_13 = arith.constant 0 : index
    %c0_14 = arith.constant 0 : index
    %c0_15 = arith.constant 0 : index
    %37 = vector.load %arg4[%c0_13, %c0_14, %c0_15] : memref<1x8x128xf32, #tpu.memory_space<vmem>>, vector<1x8x128xf32>
    %38 = vector.shape_cast %37 : vector<1x8x128xf32> to vector<8x128xf32>
    %39 = vector.shape_cast %36 : vector<8x128xf32> to vector<1x8x128xf32>
    tpu.vector_store %arg4[%c0_13, %c0_14, %c0_15], %39 {strides = array<i32>} : memref<1x8x128xf32, #tpu.memory_space<vmem>>, vector<1x8x128xf32>,
    return
  }
  func.func @transform_0(%arg0: i32, %arg1: i32) -> (i32, i32, i32) {
    %c0_i32 = arith.constant 0 : i32
    %c0_i32_0 = arith.constant 0 : i32
    return %arg0, %arg1, %c0_i32 : i32, i32, i32
  }
  func.func @transform_1(%arg0: i32, %arg1: i32) -> (i32, i32, i32) {
    %c0_i32 = arith.constant 0 : i32
    %c0_i32_0 = arith.constant 0 : i32
    return %arg0, %arg1, %c0_i32 : i32, i32, i32
  }
  func.func @transform_2(%arg0: i32, %arg1: i32) -> (i32, i32, i32) {
    %c0_i32 = arith.constant 0 : i32
    %c0_i32_0 = arith.constant 0 : i32
    %c0_i32_1 = arith.constant 0 : i32
    return %arg0, %c0_i32, %c0_i32_0 : i32, i32, i32
  }
}

</mosaic_0001>

<llo_original>
// kernel: tpu_custom_call.1
$region0: #{tpu_custom_call.1}
  #allocation0 [shape = 'u32[]', space=smem, size = 0x4, offset = 0x4, fixed_abs, tag = 'smem constant byte address 0x4 - core index']
  #allocation1 [shape = 'u32[144,128]{1,0:T(1,128)}', space=vmem, size = 0x12000, scoped, tag = 'internal scratch']
  %s0 = inlined_call_operand.hbm [shape: f32[2,32,128], index: 0, kind: input, shape index: {}]
  %s1 = inlined_call_operand.hbm [shape: s8[2,32,128], index: 1, kind: input, shape index: {}]
  %s2 = inlined_call_operand.hbm [shape: f32[2,8,128], index: 2, kind: output, shape index: {}]
  %s3 = sld [smem:[#allocation0]]
  $region53: #{tpu_custom_call.1} parent=0
    _
  %s5 = ssub.s32 1, %s3
  %s6 = scalar_select 0, %s5, %s3
  $region1: #{tpu_custom_call.1} parent=0
    #allocation2 [shape = 'u8[32768]{0}', space=vmem, size = 0x8000, scoped, tag = 'input window, operand 0']
    #allocation3 [shape = 's32[2]{0}', space=sflag, size = 0x8, scoped, tag = 'scoped memory for tpu_custom_call.1']
    #allocation4 [shape = 's32[2]{0}', space=sflag, size = 0x8, scoped, tag = 'scoped memory for tpu_custom_call.1']
    #allocation5 [shape = 'u8[8192]{0}', space=vmem, size = 0x2000, scoped, tag = 'input window, operand 1']
    #allocation6 [shape = 's32[2]{0}', space=sflag, size = 0x8, scoped, tag = 'scoped memory for tpu_custom_call.1']
    #allocation7 [shape = 'u8[8192]{0}', space=vmem, size = 0x2000, scoped, tag = 'output window, operand 0']
    %7 = vsyncpa [#allocation3], 0
    %s8 = scalar_lea.sflag [#allocation3], 1
    %9 = vsyncpa %s8, 0
    %10 = vsyncpa [#allocation6], 0
    %s11 = scalar_lea.sflag [#allocation6], 1
    %12 = vsyncpa %s11, 0
    %13 = vsyncpa [#allocation4], 0
    %s14 = scalar_lea.sflag [#allocation4], 1
    %15 = vsyncpa %s14, 0
    loop: start=0, step=1, limit=4
    $region2: #{tpu_custom_call.1} parent=1 // loop_pre_header
      _
    $region3: #{tpu_custom_call.1} parent=1 // loop_header
      %s17 = sphi 0, %s21
      %p18 = scmp.ge.s32.totalorder %s17, 4
      %s24 = sphi 0, %s36
      %s25 = sphi 0, %s32
      %s26 = sphi 0, %s24
      %s27 = sphi 0, %s25
      %s28 = sphi 0, %s26
      %s29 = sphi 0, %s27
      %s41 = sphi 0, %s43
      %s44 = sphi 0, %s41
      %s45 = sphi 0, %s44
      %s61 = sphi 0, %s45
      %s69 = sphi 0, %s71
      %s72 = sphi 0, %s69
      %s73 = sphi 0, %s72
      %s89 = sphi 0, %s73
      %s95 = sphi 0, %s97
      %s98 = sphi 0, %s95
      %s99 = sphi 0, %s98
      %s115 = sphi 0, %s99
    $region4: #{tpu_custom_call.1} parent=1 // loop_header_branch
      %20 = sbr.rel (%p18) target = $region8
    $region5: #{tpu_custom_call.1} parent=1 // loop_body
      %s22 = ssub.s32 %s17, 1
      %s23 = ssub.s32 %s17, 2
      %s30 = sadd.s32 1, %s25
      %p31 = scmp.ge.s32.totalorder %s30, 1
      %s32 = scalar_select %p31, 0, %s30
      %s33 = sadd.s32 1, %s24
      %s34 = scalar_select %p31, %s33, %s24
      %p35 = scmp.ge.s32.totalorder %s34, 2
      %s36 = scalar_select %p35, 0, %s34
      %s37 = ssub.s32 %s24, %s36
      %s38 = ssub.s32 %s25, %s32
      %s39 = sor.u32 %s37, %s38
      %p40 = scmp.eq.s32.totalorder %s39, 0
      %s42 = sadd.s32 %s41, 1
      %s43 = scalar_select %p40, %s41, %s42
      %p46 = pneg %p40
      %p47 = scmp.eq.s32.totalorder %s17, 1
      %p48 = por %p46, %p47
      %p49 = scmp.ne.s32.totalorder %s41, %s44
      %p50 = scmp.eq.s32.totalorder %s17, 0
      %p51 = por %p49, %p50
      %p52 = scmp.ne.s32.totalorder %s41, %s44
      %p53 = scmp.eq.s32.totalorder %s22, 1
      %p54 = por %p52, %p53
      %p55 = scmp.ne.s32.totalorder %s44, %s45
      %p56 = scmp.eq.s32.totalorder %s22, 0
      %p57 = por %p55, %p56
      %p58 = scmp.ne.s32.totalorder %s44, %s45
      %p59 = scmp.eq.s32.totalorder %s23, 1
      %p60 = por %p58, %p59
      %p62 = scmp.ne.s32.totalorder %s45, %s61
      %p63 = scmp.eq.s32.totalorder %s23, 0
      %p64 = por %p62, %p63
      %s65 = ssub.s32 %s24, %s36
      %s66 = ssub.s32 %s25, %s32
      %s67 = sor.u32 %s65, %s66
      %p68 = scmp.eq.s32.totalorder %s67, 0
      %s70 = sadd.s32 %s69, 1
      %s71 = scalar_select %p68, %s69, %s70
      %p74 = pneg %p68
      %p75 = scmp.eq.s32.totalorder %s17, 1
      %p76 = por %p74, %p75
      %p77 = scmp.ne.s32.totalorder %s69, %s72
      %p78 = scmp.eq.s32.totalorder %s17, 0
      %p79 = por %p77, %p78
      %p80 = scmp.ne.s32.totalorder %s69, %s72
      %p81 = scmp.eq.s32.totalorder %s22, 1
      %p82 = por %p80, %p81
      %p83 = scmp.ne.s32.totalorder %s72, %s73
      %p84 = scmp.eq.s32.totalorder %s22, 0
      %p85 = por %p83, %p84
      %p86 = scmp.ne.s32.totalorder %s72, %s73
      %p87 = scmp.eq.s32.totalorder %s23, 1
      %p88 = por %p86, %p87
      %p90 = scmp.ne.s32.totalorder %s73, %s89
      %p91 = scmp.eq.s32.totalorder %s23, 0
      %p92 = por %p90, %p91
      %s93 = ssub.s32 %s24, %s36
      %p94 = scmp.eq.s32.totalorder %s93, 0
      %s96 = sadd.s32 %s95, 1
      %s97 = scalar_select %p94, %s95, %s96
      %p100 = pneg %p94
      %p101 = scmp.eq.s32.totalorder %s17, 1
      %p102 = por %p100, %p101
      %p103 = scmp.ne.s32.totalorder %s95, %s98
      %p104 = scmp.eq.s32.totalorder %s17, 0
      %p105 = por %p103, %p104
      %p106 = scmp.ne.s32.totalorder %s95, %s98
      %p107 = scmp.eq.s32.totalorder %s22, 1
      %p108 = por %p106, %p107
      %p109 = scmp.ne.s32.totalorder %s98, %s99
      %p110 = scmp.eq.s32.totalorder %s22, 0
      %p111 = por %p109, %p110
      %p112 = scmp.ne.s32.totalorder %s98, %s99
      %p113 = scmp.eq.s32.totalorder %s23, 1
      %p114 = por %p112, %p113
      %p116 = scmp.ne.s32.totalorder %s99, %s115
      %p117 = scmp.eq.s32.totalorder %s23, 0
      %p118 = por %p116, %p117
      %p119 = scmp.le.s32.totalorder 1, %s17
      %p120 = scmp.lt.s32.totalorder %s17, 3
      %p121 = pnand %p119, %p120
      %p122 = pneg %p121
      // Predicated region
      $region9: #{tpu_custom_call.1} parent=5 // pred_check
        _
      $region10: #{tpu_custom_call.1} parent=5 // pred_check_branch
        %124 = sbr.rel (%p121) target = $region12
      $region11: #{tpu_custom_call.1} parent=5 // pred_region
        %s125 = ssub.s32 %s17, 1
      $region12: #{tpu_custom_call.1} parent=5 // pred_fallthru
        _
      %p126 = scmp.lt.s32.totalorder %s17, 2
      // Predicated region
      $region13: #{tpu_custom_call.1} parent=5 // pred_check
        %p127 = pneg %p126
      $region14: #{tpu_custom_call.1} parent=5 // pred_check_branch
        %129 = sbr.rel (%p127) target = $region16
      $region15: #{tpu_custom_call.1} parent=5 // pred_region
        // Predicated region
        $region17: #{tpu_custom_call.1} parent=15 // pred_check
          %p130 = pneg %p51
        $region18: #{tpu_custom_call.1} parent=15 // pred_check_branch
          %132 = sbr.rel (%p130) target = $region20
        $region19: #{tpu_custom_call.1} parent=15 // pred_region
          %s133 = sand.u32 %s41, 1
          %s134 = scalar_lea.sflag [#allocation3], %s133
          %s135 = sand.u32 %s41, 1
          %s136 = smul.addr %s135, 32
          %s137 = scalar_lea.vmem [#allocation2], %s136
          %s138 = smul.u32 4, %s25
          %s140 = ssub.s32 512, 512
          %141 = vsyncadd %s134, %s140
          %s142 = smul.addr %s24, 4
          %s143 = sadd.s32 %s138, %s142
          %s144 = smul.addr %s143, 128
          %s145 = scalar_lea.hbm %s0, %s144
          %s146 = sshll.u32 %s137, 4
          %s147 = int_to_ptr.vmem [resolvable:$true] %s146
          %152 = dma.hbm_to_vmem [thread:$0]  %s145, 512, %s147, %s134, 128, 128, 8
        $region20: #{tpu_custom_call.1} parent=15 // pred_fallthru
          _
        // Predicated region
        $region21: #{tpu_custom_call.1} parent=15 // pred_check
          %p153 = pneg %p79
        $region22: #{tpu_custom_call.1} parent=15 // pred_check_branch
          %155 = sbr.rel (%p153) target = $region24
        $region23: #{tpu_custom_call.1} parent=15 // pred_region
          %s156 = sand.u32 %s69, 1
          %s157 = scalar_lea.sflag [#allocation6], %s156
          %s158 = sand.u32 %s69, 1
          %s159 = smul.addr %s158, 8
          %s160 = scalar_lea.vmem [#allocation5], %s159
          %s162 = ssub.s32 128, 128
          %163 = vsyncadd %s157, %s162
          %s164 = sadd.s32 %s25, %s24
          %s165 = smul.addr %s164, 128
          %s166 = scalar_lea.hbm %s1, %s165
          %s168 = sshll.u32 %s160, 4
          %s169 = int_to_ptr.vmem [resolvable:$true] %s168
          %171 = dma.hbm_to_vmem [thread:$0]  %s166, 128, %s169, %s157
        $region24: #{tpu_custom_call.1} parent=15 // pred_fallthru
          _
      $region16: #{tpu_custom_call.1} parent=5 // pred_fallthru
        _
      %p172 = scmp.le.s32.totalorder 1, %s17
      %p173 = scmp.lt.s32.totalorder %s17, 3
      %p174 = pnand %p172, %p173
      %p175 = pneg %p174
      // Predicated region
      $region25: #{tpu_custom_call.1} parent=5 // pred_check
        _
      $region26: #{tpu_custom_call.1} parent=5 // pred_check_branch
        %177 = sbr.rel (%p174) target = $region28
      $region27: #{tpu_custom_call.1} parent=5 // pred_region
        %s178 = ssub.s32 %s17, 1
        %s179 = sand.u32 %s44, 1
        %s180 = scalar_lea.sflag [#allocation3], %s179
        %s181 = sand.u32 %s44, 1
        %s182 = smul.addr %s181, 32
        %s183 = scalar_lea.vmem [#allocation2], %s182
        // Predicated region
        $region29: #{tpu_custom_call.1} parent=27 // pred_check
          %p184 = pneg %p57
        $region30: #{tpu_custom_call.1} parent=27 // pred_check_branch
          %186 = sbr.rel (%p184) target = $region32
        $region31: #{tpu_custom_call.1} parent=27 // pred_region
          %187 = dma.done %s180, 512
        $region32: #{tpu_custom_call.1} parent=27 // pred_fallthru
          _
        %s188 = sand.u32 %s72, 1
        %s189 = scalar_lea.sflag [#allocation6], %s188
        %s190 = sand.u32 %s72, 1
        %s191 = smul.addr %s190, 8
        %s192 = scalar_lea.vmem [#allocation5], %s191
        // Predicated region
        $region33: #{tpu_custom_call.1} parent=27 // pred_check
          %p193 = pneg %p85
        $region34: #{tpu_custom_call.1} parent=27 // pred_check_branch
          %195 = sbr.rel (%p193) target = $region36
        $region35: #{tpu_custom_call.1} parent=27 // pred_region
          %196 = dma.done %s189, 128
        $region36: #{tpu_custom_call.1} parent=27 // pred_fallthru
          _
        %s197 = sand.u32 %s44, 1
        %s198 = scalar_lea.sflag [#allocation3], %s197
        %s199 = sand.u32 %s44, 1
        %s200 = smul.addr %s199, 32
        %s201 = scalar_lea.vmem [#allocation2], %s200
        %p202 = pneg %p57
        %p203 = pneg %p54
        %s204 = sand.u32 %s72, 1
        %s205 = scalar_lea.sflag [#allocation6], %s204
        %s206 = sand.u32 %s72, 1
        %s207 = smul.addr %s206, 8
        %s208 = scalar_lea.vmem [#allocation5], %s207
        %p209 = pneg %p85
        %p210 = pneg %p82
        %p211 = pneg %p111
        %p212 = pneg %p108
        %s213 = sand.u32 %s98, 1
        %s214 = scalar_lea.sflag [#allocation4], %s213
        %s215 = sand.u32 %s98, 1
        %s216 = smul.addr %s215, 8
        %s217 = scalar_lea.vmem [#allocation7], %s216
        %s218 = smul.u32 4, %s27
        %p219 = scmp.eq.s32.totalorder %s27, 0
        // Predicated region
        $region37: #{tpu_custom_call.1} parent=27 // pred_check
          %p220 = pneg %p219
        $region38: #{tpu_custom_call.1} parent=27 // pred_check_branch
          %222 = sbr.rel (%p220) target = $region40
        $region39: #{tpu_custom_call.1} parent=27 // pred_region
          %223 = vst [vmem:[%s217] sm:$0xff] 0.0
        $region40: #{tpu_custom_call.1} parent=27 // pred_fallthru
          _
        %v224 = vld [vmem:[%s183] sm:$0xff]
        %v225 = vld [vmem:[%s183 + $0x8] sm:$0xff]
        %v226 = vld [vmem:[%s183 + $0x10] sm:$0xff]
        %v227 = vld [vmem:[%s183 + $0x18] sm:$0xff]
        %v228 = vld [vmem:[%s192] sm:$0xff]
        %v229 = vunpack.c.0.s8 %v228
        %v230 = vunpack.c.1.s8 %v228
        %v231 = vunpack.c.2.s8 %v228
        %v232 = vunpack.c.3.s8 %v228
        %v233 = vcvt.s32.f32 %v229
        %v234 = vcvt.s32.f32 %v230
        %v235 = vcvt.s32.f32 %v231
        %v236 = vcvt.s32.f32 %v232
        %v237 = vmax.f32 %v224, 0.0
        %v238 = vmax.f32 %v225, 0.0
        %v239 = vmax.f32 %v226, 0.0
        %v240 = vmax.f32 %v227, 0.0
        %v241 = vmul.f32 %v224, %v233
        %v242 = vmul.f32 %v225, %v234
        %v243 = vmul.f32 %v226, %v235
        %v244 = vmul.f32 %v227, %v236
        %v245 = vsub.f32 %v237, %v241
        %v246 = vsub.f32 %v238, %v242
        %v247 = vsub.f32 %v239, %v243
        %v248 = vsub.f32 %v240, %v244
        %v249 = vand.u32 2147483647, %v224
        %v250 = vand.u32 2147483647, %v225
        %v251 = vand.u32 2147483647, %v226
        %v252 = vand.u32 2147483647, %v227
        %v253 = vsub.f32 0.0, %v249
        %v254 = vsub.f32 0.0, %v250
        %v255 = vsub.f32 0.0, %v251
        %v256 = vsub.f32 0.0, %v252
        %v257 = vmul.f32 %v253, 1.442695
        %v258 = vpow.pop %v257
        %v259 = vmul.f32 %v254, 1.442695
        %v260 = vpow.pop %v259
        %v261 = vmul.f32 %v255, 1.442695
        %v262 = vpow.pop %v261
        %v263 = vmul.f32 %v256, 1.442695
        %v264 = vpow.pop %v263
        %v265 = vadd.f32 %v258, 1.0
        %v266 = vlog2.pop %v265
        %v267 = vmul.f32 %v266, 0.6931472
        %v268 = vmul.f32 -0.5, %v258
        %v269 = vadd.f32 %v268, 1.0
        %v270 = vmul.f32 %v269, %v258
        %v271 = vand.u32 2147483647, %v258
        %vm272 = vcmp.lt.f32.partialorder %v271, 0.0004427343
        %v273 = vsel %vm272, %v270, %v267
        %v274 = vadd.f32 %v260, 1.0
        %v275 = vlog2.pop %v274
        %v276 = vmul.f32 %v275, 0.6931472
        %v277 = vmul.f32 -0.5, %v260
        %v278 = vadd.f32 %v277, 1.0
        %v279 = vmul.f32 %v278, %v260
        %v280 = vand.u32 2147483647, %v260
        %vm281 = vcmp.lt.f32.partialorder %v280, 0.0004427343
        %v282 = vsel %vm281, %v279, %v276
        %v283 = vadd.f32 %v262, 1.0
        %v284 = vlog2.pop %v283
        %v285 = vmul.f32 %v284, 0.6931472
        %v286 = vmul.f32 -0.5, %v262
        %v287 = vadd.f32 %v286, 1.0
        %v288 = vmul.f32 %v287, %v262
        %v289 = vand.u32 2147483647, %v262
        %vm290 = vcmp.lt.f32.partialorder %v289, 0.0004427343
        %v291 = vsel %vm290, %v288, %v285
        %v292 = vadd.f32 %v264, 1.0
        %v293 = vlog2.pop %v292
        %v294 = vmul.f32 %v293, 0.6931472
        %v295 = vmul.f32 -0.5, %v264
        %v296 = vadd.f32 %v295, 1.0
        %v297 = vmul.f32 %v296, %v264
        %v298 = vand.u32 2147483647, %v264
        %vm299 = vcmp.lt.f32.partialorder %v298, 0.0004427343
        %v300 = vsel %vm299, %v297, %v294
        %v301 = vadd.f32 %v245, %v273
        %v302 = vadd.f32 %v246, %v282
        %v303 = vadd.f32 %v247, %v291
        %v304 = vadd.f32 %v248, %v300
        %v305 = vlaneseq
        %v306 = vshrl.u32 %v305, 7
        %v307 = vadd.s32 %v306, 8
        %v308 = vadd.s32 %v306, 16
        %v309 = vadd.s32 %v306, 24
        %v310 = vlaneseq
        %v311 = vand.u32 %v310, 127
        %s312 = smul.u32 %s26, 32
        %s313 = smul.u32 %s27, 32
        %s314 = sadd.s32 %s312, %s313
        %v315 = vstv %s314
        %v316 = vadd.s32 %v315, %v306
        %v317 = vadd.s32 %v315, %v307
        %v318 = vadd.s32 %v315, %v308
        %v319 = vadd.s32 %v315, %v309
        %v320 = vmul.u32 %v316, 128
        %v321 = vmul.u32 %v317, 128
        %v322 = vmul.u32 %v318, 128
        %v323 = vmul.u32 %v319, 128
        %v324 = vadd.s32 %v320, %v311
        %v325 = vadd.s32 %v321, %v311
        %v326 = vadd.s32 %v322, %v311
        %v327 = vadd.s32 %v323, %v311
        %vm328 = vcmp.lt.s32.totalorder %v324, 8
        %vm329 = vcmp.lt.s32.totalorder %v325, 8
        %vm330 = vcmp.lt.s32.totalorder %v326, 8
        %vm331 = vcmp.lt.s32.totalorder %v327, 8
        %v332 = vsel %vm328, %v301, 0.0
        %v333 = vsel %vm329, %v302, 0.0
        %v334 = vsel %vm330, %v303, 0.0
        %v335 = vsel %vm331, %v304, 0.0
        %v336 = vadd.f32 %v332, %v333
        %v337 = vadd.f32 %v336, %v334
        %v338 = vadd.f32 %v337, %v335
        %v339 = vld [vmem:[%s217] sm:$0xff]
        %v340 = vadd.f32 %v339, %v338
        %341 = vst [vmem:[%s217] sm:$0xff] %v340
        %s342 = sand.u32 %s98, 1
        %s343 = scalar_lea.sflag [#allocation4], %s342
        %s344 = sand.u32 %s98, 1
        %s345 = smul.addr %s344, 8
        %s346 = scalar_lea.vmem [#allocation7], %s345
        // Predicated region
        $region41: #{tpu_custom_call.1} parent=27 // pred_check
          %p347 = pneg %p108
        $region42: #{tpu_custom_call.1} parent=27 // pred_check_branch
          %349 = sbr.rel (%p347) target = $region44
        $region43: #{tpu_custom_call.1} parent=27 // pred_region
          %s351 = ssub.s32 128, 128
          %352 = vsyncadd %s343, %s351
          %s353 = smul.addr %s26, 128
          %s354 = scalar_lea.hbm %s2, %s353
          %s356 = sshll.u32 %s346, 4
          %s357 = int_to_ptr.vmem [resolvable:$true] %s356
          %359 = dma.vmem_to_hbm [thread:$0]  %s357, 128, %s354, %s343
        $region44: #{tpu_custom_call.1} parent=27 // pred_fallthru
          _
      $region28: #{tpu_custom_call.1} parent=5 // pred_fallthru
        _
      %p360 = scmp.le.s32.totalorder 2, %s17
      // Predicated region
      $region45: #{tpu_custom_call.1} parent=5 // pred_check
        %p361 = pneg %p360
      $region46: #{tpu_custom_call.1} parent=5 // pred_check_branch
        %363 = sbr.rel (%p361) target = $region48
      $region47: #{tpu_custom_call.1} parent=5 // pred_region
        %s364 = ssub.s32 %s17, 2
        // Predicated region
        $region49: #{tpu_custom_call.1} parent=47 // pred_check
          %p365 = pneg %p114
        $region50: #{tpu_custom_call.1} parent=47 // pred_check_branch
          %367 = sbr.rel (%p365) target = $region52
        $region51: #{tpu_custom_call.1} parent=47 // pred_region
          %s368 = sand.u32 %s99, 1
          %s369 = scalar_lea.sflag [#allocation4], %s368
          %s370 = sand.u32 %s99, 1
          %s371 = smul.addr %s370, 8
          %s372 = scalar_lea.vmem [#allocation7], %s371
          %373 = dma.done %s369, 128
        $region52: #{tpu_custom_call.1} parent=47 // pred_fallthru
          _
      $region48: #{tpu_custom_call.1} parent=5 // pred_fallthru
        _
    $region6: #{tpu_custom_call.1} parent=1 // loop_footer
      %s21 = sadd.s32 1, %s17
    $region7: #{tpu_custom_call.1} parent=1 // loop_footer_branch
      %16 = sbr.rel target = $region3
    $region8: #{tpu_custom_call.1} parent=1 // loop_exit
      _
    %374 = vsyncpa [#allocation3], 1
    %s375 = scalar_lea.sflag [#allocation3], 1
    %376 = vsyncpa %s375, 1
    %377 = vsyncpa [#allocation6], 1
    %s378 = scalar_lea.sflag [#allocation6], 1
    %379 = vsyncpa %s378, 1
    %380 = vsyncpa [#allocation4], 1
    %s381 = scalar_lea.sflag [#allocation4], 1
    %382 = vsyncpa %s381, 1

</llo_original>
